<compile_context>
chip_gen: v7x
topology: tpu7x:2x2x1
jax: 0.10.0
libtpu: 0.0.40
codegen_flags: <defaults>
</compile_context>

<pallas_src>
import math

import numpy as np
import jax
import jax.numpy as jnp
from jax import lax
from jax.experimental import pallas as pl
from jax.experimental.pallas import tpu as pltpu


# ----------------------------- parameter setup ------------------------------

def get_sinusoid_encoding(position_size: int, hidden_size: int) -> np.ndarray:
    """Same math as the PyTorch reference (sin on even dims, cos on odd dims)."""
    pos = np.arange(position_size, dtype=np.float64)[:, None]
    idx = np.arange(hidden_size, dtype=np.float64)[None, :]
    angle = pos / np.power(10000.0, 2.0 * np.floor(idx / 2.0) / hidden_size)
    enc = np.array(angle)
    enc[:, 0::2] = np.sin(angle[:, 0::2])
    enc[:, 1::2] = np.cos(angle[:, 1::2])
    return enc.astype(np.float32)


def _round_up(a: int, b: int) -> int:
    return (a + b - 1) // b * b


def _vmem_capacity_bytes() -> int:
    try:
        return int(pltpu.get_tpu_info().vmem_capacity_bytes)
    except Exception:
        return 64 * 1024 * 1024          # conservative default (v7x per-TC VMEM)


_BUFFERED_ONE_OK = None


def _buffered_one_supported() -> bool:
    """One-time probe: does pipeline_mode=pl.Buffered(1) lower on this stack?"""
    global _BUFFERED_ONE_OK
    if _BUFFERED_ONE_OK is None:
        ok = False
        if hasattr(pl, "Buffered"):
            try:
                def _probe(x_ref, o_ref):
                    o_ref[...] = x_ref[...]

                out = pl.pallas_call(
                    _probe,
                    out_shape=jax.ShapeDtypeStruct((8, 128), jnp.float32),
                    grid=(1,),
                    in_specs=[pl.BlockSpec((8, 128), lambda i: (0, 0),
                                           pipeline_mode=pl.Buffered(1))],
                    out_specs=pl.BlockSpec((8, 128), lambda i: (0, 0)),
                )(jnp.zeros((8, 128), jnp.float32))
                jax.block_until_ready(out)
                ok = True
            except Exception:
                ok = False
        _BUFFERED_ONE_OK = ok
    return _BUFFERED_ONE_OK


def _const_spec(shape, index_map):
    """Constant-index_map block (VMEM-resident across the whole grid).

    Such a block never re-DMAs, so the default double buffer only doubles its
    VMEM footprint; request a single buffer when supported (matters most on
    v7x's 64 MiB VMEM)."""
    if _buffered_one_supported():
        return pl.BlockSpec(shape, index_map, pipeline_mode=pl.Buffered(1))
    return pl.BlockSpec(shape, index_map)


# ------------------------------ Pallas kernels -------------------------------

def _layer_norm(x, gamma, beta, out_dtype):
    # Two-pass variance E[(x - mean)^2]: robust vs. E[x^2] - E[x]^2 cancellation.
    mean = jnp.mean(x, axis=-1, keepdims=True)
    c = x - mean
    var = jnp.mean(c * c, axis=-1, keepdims=True)
    xn = c * lax.rsqrt(var + jnp.float32(1e-5))
    return (xn * gamma + beta).astype(out_dtype)


def _resident_kernel(ids_ref, tab_ref, gamma_ref, beta_ref, out_ref):
    """Small-vocab path.

    ids_ref : (T, 3) int32, already offset into the fused table
              (word id, V + seg id, V + G + pos id).
    tab_ref : (K_pad, H) fused [sqrt(H)*word ; sqrt(H)*seg ; pos] table,
              native dtype, VMEM resident.
    """
    T = out_ref.shape[0]
    K = tab_ref.shape[0]
    col = lax.broadcasted_iota(jnp.int32, (T, K), 1)
    hit = ((col == ids_ref[:, 0:1]) | (col == ids_ref[:, 1:2])
           | (col == ids_ref[:, 2:3]))
    # One-hot in the table's NATIVE dtype (0/1 exact in bf16); a single MXU
    # matmul with f32 accumulation replaces all three gathers + two adds.
    onehot = hit.astype(tab_ref.dtype)
    x = jnp.dot(onehot, tab_ref[...], preferred_element_type=jnp.float32)
    out_ref[...] = _layer_norm(x, gamma_ref[...], beta_ref[...], out_ref.dtype)


def _streaming_kernel(w_ids_smem,                 # (N_pad,) int32, SMEM (scalar prefetch)
                      ids_ref,                    # (T, 3) int32 (cols 1,2: offset seg/pos)
                      sp_tab_ref,                 # (Ksp, H) fused [sqrt(H)*seg ; pos]
                      gamma_ref, beta_ref,        # (1, H) f32
                      word_hbm_ref,               # (V, H) word table, left in HBM
                      out_ref,                    # (T, H)
                      wrows_ref,                  # VMEM scratch (T, H), word dtype
                      sem_ref):                   # DMA semaphore (1,)
    """Large-vocab path: manual DMA row gather of the word table."""
    T, H = out_ref.shape
    base = pl.program_id(0) * T

    # 1) Issue all T word-row gather DMAs (HBM -> VMEM scratch).
    def _issue(t, carry):
        row = w_ids_smem[base + t]
        pltpu.make_async_copy(word_hbm_ref.at[pl.ds(row, 1), :],
                              wrows_ref.at[pl.ds(t, 1), :],
                              sem_ref.at[0]).start()
        return carry

    lax.fori_loop(0, T, _issue, 0)

    # 2) Overlap: combine the tiny resident segment/position tables with one
    #    small one-hot matmul while the gathers are in flight.
    Ksp = sp_tab_ref.shape[0]
    col = lax.broadcasted_iota(jnp.int32, (T, Ksp), 1)
    hit = (col == ids_ref[:, 1:2]) | (col == ids_ref[:, 2:3])
    sp = jnp.dot(hit.astype(sp_tab_ref.dtype), sp_tab_ref[...],
                 preferred_element_type=jnp.float32)

    # 3) Wait for every gather (all copies identical size; T waits on the shared
    #    semaphore form a full barrier regardless of completion order).
    def _wait(t, carry):
        pltpu.make_async_copy(word_hbm_ref.at[pl.ds(0, 1), :],
                              wrows_ref.at[pl.ds(t, 1), :],
                              sem_ref.at[0]).wait()
        return carry

    lax.fori_loop(0, T, _wait, 0)

    scale = jnp.float32(math.sqrt(H))
    x = scale * wrows_ref[...].astype(jnp.float32) + sp
    out_ref[...] = _layer_norm(x, gamma_ref[...], beta_ref[...], out_ref.dtype)


# --------------------------------- wrapper -----------------------------------

def transformer_embeddings(input_ids, segment_ids, word_table, seg_table,
                           pos_table, gamma, beta, position_ids=None,
                           out_dtype=None, force_streaming=False,
                           resident_word_table_bytes=4 * 1024 * 1024):
    """Forward pass of TransformerEmbeddings (eval mode: dropout == identity)."""
    B, S = input_ids.shape
    V, H = word_table.shape
    G = seg_table.shape[0]
    if out_dtype is None:
        # bf16 output halves the dominant HBM store stream when the consumer is bf16.
        out_dtype = word_table.dtype
    if position_ids is None:
        # cumsum(ones) - 1  ==  arange(S) broadcast per row
        position_ids = jnp.broadcast_to(
            jnp.arange(S, dtype=jnp.int32)[None, :], (B, S))

    scale = float(math.sqrt(H))
    N = B * S
    vmem_cap = _vmem_capacity_bytes()

    word_bytes = V * H * word_table.dtype.itemsize
    # One-hot-matmul gather only pays off while the word table is small; beyond
    # a few MiB keep it in HBM and row-gather with DMAs (memory-bound regime).
    use_resident = (not force_streaming) and (
        word_bytes <= min(resident_word_table_bytes, vmem_cap // 8))

    # Token-tile size: sublane aligned (mult of 8); at least 2 tiles whenever N
    # allows so v7x's 2nd TensorCore has work; up to 512 tokens per tile.
    t_max = 512 if use_resident else 256
    if N <= 8:
        T = 8
    else:
        T = max(8, min(t_max, _round_up((N + 1) // 2, 8)))
    N_pad = _round_up(N, T)
    num_tiles = N_pad // T

    def flat_pad(ids):
        ids = ids.reshape(-1).astype(jnp.int32)
        return jnp.pad(ids, (0, N_pad - N))      # pad with 0 (valid row index)

    w_ids = flat_pad(input_ids)
    s_ids = flat_pad(segment_ids)
    p_ids = flat_pad(position_ids)

    g2 = gamma.reshape(1, H).astype(jnp.float32)
    b2 = beta.reshape(1, H).astype(jnp.float32)

    def pad_rows_to(tab, mult):
        r = tab.shape[0]
        r_pad = _round_up(r, mult)
        if r_pad != r:
            tab = jnp.pad(tab, ((0, r_pad - r), (0, 0)))
        return tab

    out_itemsize = np.dtype(out_dtype).itemsize

    if use_resident:
        # Fuse the three tables into a single MXU operand.  sqrt(H) is folded
        # into the word/seg rows *while concatenating* (which we do anyway), so
        # it is free in the wrapper and keeps the one-hot exactly 0/1.
        tab = jnp.concatenate(
            [(word_table * scale).astype(word_table.dtype),       # rows [0, V)
             (seg_table * scale).astype(word_table.dtype),        # rows [V, V+G)
             pos_table.astype(word_table.dtype)],                 # rows [V+G, V+G+P)
            axis=0)
        tab = pad_rows_to(tab, 128)             # MXU K dim: multiple of 128
        K_pad = tab.shape[0]

        # Single merged id stream: (N_pad, 3) with offsets baked in.
        ids3 = jnp.stack([w_ids, s_ids + V, p_ids + V + G], axis=-1)

        itemsize = tab.dtype.itemsize
        need = (2 * K_pad * H * itemsize                 # table (x2 if double-buffered)
                + 2 * T * 3 * 4                          # id tiles (double-buffered)
                + 2 * T * H * out_itemsize               # output tiles
                + T * K_pad * 4                          # one-hot temporary
                + (2 << 20))
        vmem_limit = int(min(max(need, 32 << 20),
                             max(vmem_cap - (8 << 20), 32 << 20)))

        out = pl.pallas_call(
            _resident_kernel,
            out_shape=jax.ShapeDtypeStruct((N_pad, H), out_dtype),
            grid=(num_tiles,),
            in_specs=[
                pl.BlockSpec((T, 3), lambda i: (i, 0)),
                _const_spec((K_pad, H), lambda i: (0, 0)),
                _const_spec((1, H), lambda i: (0, 0)),
                _const_spec((1, H), lambda i: (0, 0)),
            ],
            out_specs=pl.BlockSpec((T, H), lambda i: (i, 0)),
            compiler_params=pltpu.CompilerParams(
                dimension_semantics=("parallel",),
                vmem_limit_bytes=vmem_limit),
        )(ids3, tab, g2, b2)
    else:
        # Streaming path: word table stays in HBM, seg/pos tables fused + resident.
        sp_tab = jnp.concatenate(
            [(seg_table * scale).astype(word_table.dtype),        # rows [0, G)
             pos_table.astype(word_table.dtype)],                 # rows [G, G+P)
            axis=0)
        sp_tab = pad_rows_to(sp_tab, 128)
        Ksp = sp_tab.shape[0]

        ids3 = jnp.stack([w_ids, s_ids, p_ids + G], axis=-1)

        need = (2 * Ksp * H * sp_tab.dtype.itemsize
                + 2 * T * 3 * 4
                + 2 * T * H * out_itemsize
                + T * Ksp * 4
                + T * H * word_table.dtype.itemsize      # gather scratch
                + (2 << 20))
        vmem_limit = int(min(max(need, 32 << 20),
                             max(vmem_cap - (8 << 20), 32 << 20)))

        grid_spec = pltpu.PrefetchScalarGridSpec(
            num_scalar_prefetch=1,                       # word ids -> SMEM
            grid=(num_tiles,),
            in_specs=[
                pl.BlockSpec((T, 3), lambda i, wids: (i, 0)),
                _const_spec((Ksp, H), lambda i, wids: (0, 0)),
                _const_spec((1, H), lambda i, wids: (0, 0)),
                _const_spec((1, H), lambda i, wids: (0, 0)),
                pl.BlockSpec(memory_space=pl.ANY),       # word table stays in HBM
            ],
            out_specs=pl.BlockSpec((T, H), lambda i, wids: (i, 0)),
            scratch_shapes=[
                pltpu.VMEM((T, H), word_table.dtype),
                pltpu.SemaphoreType.DMA((1,)),
            ],
        )
        out = pl.pallas_call(
            _streaming_kernel,
            out_shape=jax.ShapeDtypeStruct((N_pad, H), out_dtype),
            grid_spec=grid_spec,
            compiler_params=pltpu.CompilerParams(
                dimension_semantics=("arbitrary",),      # scratch shared across steps
                vmem_limit_bytes=vmem_limit),
        )(w_ids, ids3, sp_tab, g2, b2, word_table)

    return out[:N].reshape(B, S, H)


# ------------------------------ reference (JAX) ------------------------------

def _reference(input_ids, segment_ids, word_table, seg_table, pos_table, gamma, beta):
    B, S = input_ids.shape
    position_ids = jnp.broadcast_to(jnp.arange(S)[None, :], (B, S))
    scale = math.sqrt(word_table.shape[-1])
    x = (scale * word_table[input_ids]
         + scale * seg_table[segment_ids]
         + pos_table[position_ids])
    mean = jnp.mean(x, axis=-1, keepdims=True)
    var = jnp.mean((x - mean) ** 2, axis=-1, keepdims=True)
    xn = (x - mean) / jnp.sqrt(var + 1e-5)
    return xn * gamma + beta


# ----------------------------------- main -------------------------------------

if __name__ == "__main__":
    vocab_size = 50
    hidden_size = 32
    position_size = 16
    segment_size = 2
    B, S = 2, 8

    key = jax.random.PRNGKey(0)
    k_word, k_seg, k_ids, k_segids = jax.random.split(key, 4)

    # nn.Embedding init: normal(0, hidden_size ** -0.5); padding_idx=0 row zeroed.
    word_table = (jax.random.normal(k_word, (vocab_size, hidden_size), jnp.float32)
                  * hidden_size ** (-0.5))
    word_table = word_table.at[0].set(0.0)
    seg_table = (jax.random.normal(k_seg, (segment_size, hidden_size), jnp.float32)
                 * hidden_size ** (-0.5))
    pos_table = jnp.asarray(get_sinusoid_encoding(position_size, hidden_size))
    gamma = jnp.ones((hidden_size,), jnp.float32)
    beta = jnp.zeros((hidden_size,), jnp.float32)

    input_ids = jax.random.randint(k_ids, (B, S), 1, vocab_size, dtype=jnp.int32)
    segment_ids = jax.random.randint(k_segids, (B, S), 0, segment_size, dtype=jnp.int32)

    ref = _reference(input_ids, segment_ids, word_table, seg_table, pos_table,
                     gamma, beta)

    # Small-vocab path (fused VMEM-resident table, one-hot matmul gather).
    out_res = transformer_embeddings(input_ids, segment_ids, word_table, seg_table,
                                     pos_table, gamma, beta)
    out_res = jax.block_until_ready(out_res)
    np.testing.assert_allclose(np.asarray(out_res), np.asarray(ref),
                               rtol=1e-4, atol=1e-4)

    # Large-vocab path (word table left in HBM + manual DMA row gather), forced
    # here at toy size so both code paths are exercised and validated.
    out_str = transformer_embeddings(input_ids, segment_ids, word_table, seg_table,
                                     pos_table, gamma, beta, force_streaming=True)
    out_str = jax.block_until_ready(out_str)
    np.testing.assert_allclose(np.asarray(out_str), np.asarray(ref),
                               rtol=1e-4, atol=1e-4)

    print("KERNEL_OK")
</pallas_src>

<mosaic_0001>
module attributes {stable_mosaic.version = 11 : i64} {
  func.func @_probe(%arg0: i32, %arg1: memref<8x128xf32, #tpu.memory_space<vmem>>, %arg2: memref<8x128xf32, #tpu.memory_space<vmem>>) attributes {dimension_semantics = [#tpu.dimension_semantics<arbitrary>], iteration_bounds = array<i64: 1>, scalar_prefetch = 0 : i64, scratch_operands = 0 : i64, tpu.core_type = #tpu.core_type<tc>, window_params = [{pipeline_mode = #tpu.pipeline_mode<synchronous>, transform_indices = @transform_0, window_bounds = array<i64: 8, 128>}, {pipeline_mode = #tpu.pipeline_mode<synchronous>, transform_indices = @transform_1, window_bounds = array<i64: 8, 128>}]} {
    %c0 = arith.constant 0 : index
    %c0_0 = arith.constant 0 : index
    %0 = vector.load %arg1[%c0, %c0_0] : memref<8x128xf32, #tpu.memory_space<vmem>>, vector<8x128xf32>
    %c0_1 = arith.constant 0 : index
    %c0_2 = arith.constant 0 : index
    %1 = vector.load %arg2[%c0_1, %c0_2] : memref<8x128xf32, #tpu.memory_space<vmem>>, vector<8x128xf32>
    tpu.vector_store %arg2[%c0_1, %c0_2], %0 {strides = array<i32>} : memref<8x128xf32, #tpu.memory_space<vmem>>, vector<8x128xf32>,
    return
  }
  func.func @transform_0(%arg0: i32) -> (i32, i32) {
    %c0_i32 = arith.constant 0 : i32
    %c0_i32_0 = arith.constant 0 : i32
    %c0_i32_1 = arith.constant 0 : i32
    return %c0_i32, %c0_i32_0 : i32, i32
  }
  func.func @transform_1(%arg0: i32) -> (i32, i32) {
    %c0_i32 = arith.constant 0 : i32
    %c0_i32_0 = arith.constant 0 : i32
    %c0_i32_1 = arith.constant 0 : i32
    return %c0_i32, %c0_i32_0 : i32, i32
  }
}

module attributes {stable_mosaic.version = 11 : i64} {
  func.func @_resident_kernel(%arg0: i32, %arg1: memref<8x3xi32, #tpu.memory_space<vmem>>, %arg2: memref<128x32xf32, #tpu.memory_space<vmem>>, %arg3: memref<1x32xf32, #tpu.memory_space<vmem>>, %arg4: memref<1x32xf32, #tpu.memory_space<vmem>>, %arg5: memref<8x32xf32, #tpu.memory_space<vmem>>) attributes {dimension_semantics = [#tpu.dimension_semantics<parallel>], iteration_bounds = array<i64: 2>, scalar_prefetch = 0 : i64, scratch_operands = 0 : i64, tpu.core_type = #tpu.core_type<tc>, window_params = [{transform_indices = @transform_0, window_bounds = array<i64: 8, 3>}, {pipeline_mode = #tpu.pipeline_mode<synchronous>, transform_indices = @transform_1, window_bounds = array<i64: 128, 32>}, {pipeline_mode = #tpu.pipeline_mode<synchronous>, transform_indices = @transform_2, window_bounds = array<i64: 1, 32>}, {pipeline_mode = #tpu.pipeline_mode<synchronous>, transform_indices = @transform_3, window_bounds = array<i64: 1, 32>}, {transform_indices = @transform_4, window_bounds = array<i64: 8, 32>}]} {
    %0 = tpu.iota {dimensions = array<i32: 1>} : vector<8x128xi32>
    %c0 = arith.constant 0 : index
    %c0_0 = arith.constant 0 : index
    %1 = vector.load %arg1[%c0, %c0_0] : memref<8x3xi32, #tpu.memory_space<vmem>>, vector<8x1xi32>
    %2 = vector.broadcast %1 : vector<8x1xi32> to vector<8x128xi32>
    %3 = arith.cmpi eq, %0, %2 : vector<8x128xi32>
    %c0_1 = arith.constant 0 : index
    %c1 = arith.constant 1 : index
    %4 = vector.load %arg1[%c0_1, %c1] : memref<8x3xi32, #tpu.memory_space<vmem>>, vector<8x1xi32>
    %5 = vector.broadcast %4 : vector<8x1xi32> to vector<8x128xi32>
    %6 = arith.cmpi eq, %0, %5 : vector<8x128xi32>
    %7 = arith.ori %3, %6 : vector<8x128xi1>
    %c0_2 = arith.constant 0 : index
    %c2 = arith.constant 2 : index
    %8 = vector.load %arg1[%c0_2, %c2] : memref<8x3xi32, #tpu.memory_space<vmem>>, vector<8x1xi32>
    %9 = vector.broadcast %8 : vector<8x1xi32> to vector<8x128xi32>
    %10 = arith.cmpi eq, %0, %9 : vector<8x128xi32>
    %11 = arith.ori %7, %10 : vector<8x128xi1>
    %12 = arith.extui %11 : vector<8x128xi1> to vector<8x128xi32>
    %13 = arith.sitofp %12 : vector<8x128xi32> to vector<8x128xf32>
    %c0_3 = arith.constant 0 : index
    %c0_4 = arith.constant 0 : index
    %14 = vector.load %arg2[%c0_3, %c0_4] : memref<128x32xf32, #tpu.memory_space<vmem>>, vector<128x32xf32>
    %cst = arith.constant dense<0.000000e+00> : vector<8x32xf32>
    %15 = tpu.matmul %13, %14, %cst {dimension_numbers = #tpu.dot_dimension_numbers<[1], [0], [0], [1], [0, 0, 1, 1], [], []>} : vector<8x128xf32>, vector<128x32xf32>, vector<8x32xf32> -> vector<8x32xf32>
    %c0_5 = arith.constant 0 : index
    %c0_6 = arith.constant 0 : index
    %16 = vector.load %arg3[%c0_5, %c0_6] : memref<1x32xf32, #tpu.memory_space<vmem>>, vector<1x32xf32>
    %c0_7 = arith.constant 0 : index
    %c0_8 = arith.constant 0 : index
    %17 = vector.load %arg4[%c0_7, %c0_8] : memref<1x32xf32, #tpu.memory_space<vmem>>, vector<1x32xf32>
    %cst_9 = arith.constant dense<0.000000e+00> : vector<8xf32>
    %18 = vector.multi_reduction <add>, %15, %cst_9 [1] : vector<8x32xf32> to vector<8xf32>
    %19 = vector.shape_cast %18 : vector<8xf32> to vector<8x1xf32>
    %cst_10 = arith.constant 3.200000e+01 : f32
    %20 = vector.broadcast %cst_10 : f32 to vector<8x1xf32>
    %21 = arith.divf %19, %20 : vector<8x1xf32>
    %22 = vector.broadcast %21 : vector<8x1xf32> to vector<8x32xf32>
    %23 = arith.subf %15, %22 : vector<8x32xf32>
    %24 = arith.mulf %23, %23 : vector<8x32xf32>
    %cst_11 = arith.constant dense<0.000000e+00> : vector<8xf32>
    %25 = vector.multi_reduction <add>, %24, %cst_11 [1] : vector<8x32xf32> to vector<8xf32>
    %26 = vector.shape_cast %25 : vector<8xf32> to vector<8x1xf32>
    %cst_12 = arith.constant 3.200000e+01 : f32
    %27 = vector.broadcast %cst_12 : f32 to vector<8x1xf32>
    %28 = arith.divf %26, %27 : vector<8x1xf32>
    %cst_13 = arith.constant 9.99999974E-6 : f32
    %29 = vector.broadcast %cst_13 : f32 to vector<8x1xf32>
    %30 = arith.addf %28, %29 : vector<8x1xf32>
    %31 = math.rsqrt %30 : vector<8x1xf32>
    %32 = vector.broadcast %31 : vector<8x1xf32> to vector<8x32xf32>
    %33 = arith.mulf %23, %32 : vector<8x32xf32>
    %34 = vector.broadcast %16 : vector<1x32xf32> to vector<8x32xf32>
    %35 = arith.mulf %33, %34 : vector<8x32xf32>
    %36 = vector.broadcast %17 : vector<1x32xf32> to vector<8x32xf32>
    %37 = arith.addf %35, %36 : vector<8x32xf32>
    %c0_14 = arith.constant 0 : index
    %c0_15 = arith.constant 0 : index
    %38 = vector.load %arg5[%c0_14, %c0_15] : memref<8x32xf32, #tpu.memory_space<vmem>>, vector<8x32xf32>
    tpu.vector_store %arg5[%c0_14, %c0_15], %37 {strides = array<i32>} : memref<8x32xf32, #tpu.memory_space<vmem>>, vector<8x32xf32>,
    return
  }
  func.func @transform_0(%arg0: i32) -> (i32, i32) {
    %c0_i32 = arith.constant 0 : i32
    %c0_i32_0 = arith.constant 0 : i32
    return %arg0, %c0_i32 : i32, i32
  }
  func.func @transform_1(%arg0: i32) -> (i32, i32) {
    %c0_i32 = arith.constant 0 : i32
    %c0_i32_0 = arith.constant 0 : i32
    %c0_i32_1 = arith.constant 0 : i32
    return %c0_i32, %c0_i32_0 : i32, i32
  }
  func.func @transform_2(%arg0: i32) -> (i32, i32) {
    %c0_i32 = arith.constant 0 : i32
    %c0_i32_0 = arith.constant 0 : i32
    %c0_i32_1 = arith.constant 0 : i32
    return %c0_i32, %c0_i32_0 : i32, i32
  }
  func.func @transform_3(%arg0: i32) -> (i32, i32) {
    %c0_i32 = arith.constant 0 : i32
    %c0_i32_0 = arith.constant 0 : i32
    %c0_i32_1 = arith.constant 0 : i32
    return %c0_i32, %c0_i32_0 : i32, i32
  }
  func.func @transform_4(%arg0: i32) -> (i32, i32) {
    %c0_i32 = arith.constant 0 : i32
    %c0_i32_0 = arith.constant 0 : i32
    return %arg0, %c0_i32 : i32, i32
  }
}

</mosaic_0001>

<llo_original>
// kernel: tpu_custom_call.1
$region0: #{tpu_custom_call.1}
  #allocation0 [shape = 'u32[]', space=smem, size = 0x4, offset = 0x4, fixed_abs, tag = 'smem constant byte address 0x4 - core index']
  #allocation1 [shape = 'u32[144,128]{1,0:T(1,128)}', space=vmem, size = 0x12000, scoped, tag = 'internal scratch']
  %s0 = inlined_call_operand.hbm [shape: f32[8,128], index: 0, kind: input, shape index: {}]
  %s1 = inlined_call_operand.hbm [shape: f32[8,128], index: 1, kind: output, shape index: {}]
  %s2 = sld [smem:[#allocation0]]
  $region18: #{tpu_custom_call.1} parent=0
    _
  %s4 = ssub.s32 1, %s2
  %s5 = scalar_select 0, %s4, %s2
  $region1: #{tpu_custom_call.1} parent=0
    #allocation2 [shape = 'u8[4096]{0}', space=vmem, size = 0x1000, scoped, tag = 'input window, operand 0, single buffered']
    #allocation3 [shape = 's32[1]{0}', space=sflag, size = 0x4, scoped, tag = 'scoped memory for tpu_custom_call.1']
    #allocation4 [shape = 's32[1]{0}', space=sflag, size = 0x4, scoped, tag = 'scoped memory for tpu_custom_call.1']
    #allocation5 [shape = 'u8[4096]{0}', space=vmem, size = 0x1000, scoped, tag = 'output window, operand 0, single buffered']
    %6 = vsyncpa [#allocation3], 0
    %7 = vsyncpa [#allocation4], 0
    // Predicated region
    $region2: #{tpu_custom_call.1} parent=1 // pred_check
      _
    $region3: #{tpu_custom_call.1} parent=1 // pred_check_branch
      %9 = sbr.rel (0) target = $region5
    $region4: #{tpu_custom_call.1} parent=1 // pred_region
      %s11 = ssub.s32 128, 128
      %12 = vsyncadd [#allocation3], %s11
      %s14 = sshll.u32 [#allocation2], 4
      %s15 = int_to_ptr.vmem [resolvable:$true] %s14
      %17 = dma.hbm_to_vmem [thread:$0]  %s0, 128, %s15, [#allocation3]
    $region5: #{tpu_custom_call.1} parent=1 // pred_fallthru
      _
    // Predicated region
    $region6: #{tpu_custom_call.1} parent=1 // pred_check
      _
    $region7: #{tpu_custom_call.1} parent=1 // pred_check_branch
      %19 = sbr.rel (0) target = $region9
    $region8: #{tpu_custom_call.1} parent=1 // pred_region
      %20 = dma.done [#allocation3], 128
    $region9: #{tpu_custom_call.1} parent=1 // pred_fallthru
      _
    %v21 = vld [vmem:[#allocation2] sm:$0xff]
    %22 = vst [vmem:[#allocation5] sm:$0xff] %v21
    // Predicated region
    $region10: #{tpu_custom_call.1} parent=1 // pred_check
      _
    $region11: #{tpu_custom_call.1} parent=1 // pred_check_branch
      %24 = sbr.rel (0) target = $region13
    $region12: #{tpu_custom_call.1} parent=1 // pred_region
      %s26 = ssub.s32 128, 128
      %27 = vsyncadd [#allocation4], %s26
      %s29 = sshll.u32 [#allocation5], 4
      %s30 = int_to_ptr.vmem [resolvable:$true] %s29
      %32 = dma.vmem_to_hbm [thread:$0]  %s30, 128, %s1, [#allocation4]
    $region13: #{tpu_custom_call.1} parent=1 // pred_fallthru
      _
    // Predicated region
    $region14: #{tpu_custom_call.1} parent=1 // pred_check
      _
    $region15: #{tpu_custom_call.1} parent=1 // pred_check_branch
      %34 = sbr.rel (0) target = $region17
    $region16: #{tpu_custom_call.1} parent=1 // pred_region
      %35 = dma.done [#allocation4], 128
    $region17: #{tpu_custom_call.1} parent=1 // pred_fallthru
      _
    %36 = vsyncpa [#allocation3], 1
    %37 = vsyncpa [#allocation4], 1

// kernel: tpu_custom_call.1
$region0: #{tpu_custom_call.1}
  #allocation0 [shape = 'u32[]', space=smem, size = 0x4, offset = 0x4, fixed_abs, tag = 'smem constant byte address 0x4 - core index']
  #allocation1 [shape = 'u32[144,128]{1,0:T(1,128)}', space=vmem, size = 0x12000, scoped, tag = 'internal scratch']
  %s0 = inlined_call_operand.vmem [shape: s32[16,3], index: 0, kind: input, shape index: {}]
  %s1 = inlined_call_operand.vmem [shape: f32[128,32], index: 1, kind: input, shape index: {}]
  %s2 = inlined_call_operand.vmem [shape: f32[1,32], index: 2, kind: input, shape index: {}]
  %s3 = inlined_call_operand.vmem [shape: f32[1,32], index: 3, kind: input, shape index: {}]
  %s4 = inlined_call_operand.hbm [shape: f32[16,32], index: 4, kind: output, shape index: {}]
  %s5 = sld [smem:[#allocation0]]
  $region49: #{tpu_custom_call.1} parent=0
    _
  %s7 = ssub.s32 1, %s5
  %s8 = scalar_select 0, %s7, %s5
  $region1: #{tpu_custom_call.1} parent=0
    #allocation2 [shape = 'u8[8192]{0}', space=vmem, size = 0x2000, scoped, tag = 'output window, operand 0']
    #allocation3 [shape = 's32[2]{0}', space=sflag, size = 0x8, scoped, tag = 'scoped memory for tpu_custom_call.1']
    %9 = vsyncpa [#allocation3], 0
    %s10 = scalar_lea.sflag [#allocation3], 1
    %11 = vsyncpa %s10, 0
    loop: start=0, step=1, limit=4
    $region2: #{tpu_custom_call.1} parent=1 // loop_pre_header
      _
    $region3: #{tpu_custom_call.1} parent=1 // loop_header
      %s13 = sphi 0, %s17
      %p14 = scmp.ge.s32.totalorder %s13, 4
      %s23 = sphi 0, %s25
      %s26 = sphi 0, %s23
      %s27 = sphi 0, %s26
      %s43 = sphi 0, %s27
      %s47 = sphi 0, %s47
      %s49 = sphi 0, %s47
      %s50 = sphi 0, %s49
      %s64 = sphi 0, %s50
      %s68 = sphi 0, %s68
      %s70 = sphi 0, %s68
      %s71 = sphi 0, %s70
      %s85 = sphi 0, %s71
      %s89 = sphi 0, %s89
      %s91 = sphi 0, %s89
      %s92 = sphi 0, %s91
      %s106 = sphi 0, %s92
      %s112 = sphi 0, %s114
      %s115 = sphi 0, %s112
      %s116 = sphi 0, %s115
      %s132 = sphi 0, %s116
    $region4: #{tpu_custom_call.1} parent=1 // loop_header_branch
      %16 = sbr.rel (%p14) target = $region8
    $region5: #{tpu_custom_call.1} parent=1 // loop_body
      %s18 = ssub.s32 %s13, 1
      %s19 = ssub.s32 %s13, 2
      %s20 = sadd.s32 %s13, 1
      %s21 = ssub.s32 %s13, %s20
      %p22 = scmp.eq.s32.totalorder %s21, 0
      %s24 = sadd.s32 %s23, 1
      %s25 = scalar_select %p22, %s23, %s24
      %p28 = pneg %p22
      %p29 = scmp.eq.s32.totalorder %s13, 1
      %p30 = por %p28, %p29
      %p31 = scmp.ne.s32.totalorder %s23, %s26
      %p32 = scmp.eq.s32.totalorder %s13, 0
      %p33 = por %p31, %p32
      %p34 = scmp.ne.s32.totalorder %s23, %s26
      %p35 = scmp.eq.s32.totalorder %s18, 1
      %p36 = por %p34, %p35
      %p37 = scmp.ne.s32.totalorder %s26, %s27
      %p38 = scmp.eq.s32.totalorder %s18, 0
      %p39 = por %p37, %p38
      %p40 = scmp.ne.s32.totalorder %s26, %s27
      %p41 = scmp.eq.s32.totalorder %s19, 1
      %p42 = por %p40, %p41
      %p44 = scmp.ne.s32.totalorder %s27, %s43
      %p45 = scmp.eq.s32.totalorder %s19, 0
      %p46 = por %p44, %p45
      %s48 = sadd.s32 %s47, 1
      %p51 = scmp.eq.s32.totalorder %s13, 1
      %p52 = scmp.ne.s32.totalorder %s47, %s49
      %p53 = scmp.eq.s32.totalorder %s13, 0
      %p54 = por %p52, %p53
      %p55 = scmp.ne.s32.totalorder %s47, %s49
      %p56 = scmp.eq.s32.totalorder %s18, 1
      %p57 = por %p55, %p56
      %p58 = scmp.ne.s32.totalorder %s49, %s50
      %p59 = scmp.eq.s32.totalorder %s18, 0
      %p60 = por %p58, %p59
      %p61 = scmp.ne.s32.totalorder %s49, %s50
      %p62 = scmp.eq.s32.totalorder %s19, 1
      %p63 = por %p61, %p62
      %p65 = scmp.ne.s32.totalorder %s50, %s64
      %p66 = scmp.eq.s32.totalorder %s19, 0
      %p67 = por %p65, %p66
      %s69 = sadd.s32 %s68, 1
      %p72 = scmp.eq.s32.totalorder %s13, 1
      %p73 = scmp.ne.s32.totalorder %s68, %s70
      %p74 = scmp.eq.s32.totalorder %s13, 0
      %p75 = por %p73, %p74
      %p76 = scmp.ne.s32.totalorder %s68, %s70
      %p77 = scmp.eq.s32.totalorder %s18, 1
      %p78 = por %p76, %p77
      %p79 = scmp.ne.s32.totalorder %s70, %s71
      %p80 = scmp.eq.s32.totalorder %s18, 0
      %p81 = por %p79, %p80
      %p82 = scmp.ne.s32.totalorder %s70, %s71
      %p83 = scmp.eq.s32.totalorder %s19, 1
      %p84 = por %p82, %p83
      %p86 = scmp.ne.s32.totalorder %s71, %s85
      %p87 = scmp.eq.s32.totalorder %s19, 0
      %p88 = por %p86, %p87
      %s90 = sadd.s32 %s89, 1
      %p93 = scmp.eq.s32.totalorder %s13, 1
      %p94 = scmp.ne.s32.totalorder %s89, %s91
      %p95 = scmp.eq.s32.totalorder %s13, 0
      %p96 = por %p94, %p95
      %p97 = scmp.ne.s32.totalorder %s89, %s91
      %p98 = scmp.eq.s32.totalorder %s18, 1
      %p99 = por %p97, %p98
      %p100 = scmp.ne.s32.totalorder %s91, %s92
      %p101 = scmp.eq.s32.totalorder %s18, 0
      %p102 = por %p100, %p101
      %p103 = scmp.ne.s32.totalorder %s91, %s92
      %p104 = scmp.eq.s32.totalorder %s19, 1
      %p105 = por %p103, %p104
      %p107 = scmp.ne.s32.totalorder %s92, %s106
      %p108 = scmp.eq.s32.totalorder %s19, 0
      %p109 = por %p107, %p108
      %s110 = ssub.s32 %s13, %s20
      %p111 = scmp.eq.s32.totalorder %s110, 0
      %s113 = sadd.s32 %s112, 1
      %s114 = scalar_select %p111, %s112, %s113
      %p117 = pneg %p111
      %p118 = scmp.eq.s32.totalorder %s13, 1
      %p119 = por %p117, %p118
      %p120 = scmp.ne.s32.totalorder %s112, %s115
      %p121 = scmp.eq.s32.totalorder %s13, 0
      %p122 = por %p120, %p121
      %p123 = scmp.ne.s32.totalorder %s112, %s115
      %p124 = scmp.eq.s32.totalorder %s18, 1
      %p125 = por %p123, %p124
      %p126 = scmp.ne.s32.totalorder %s115, %s116
      %p127 = scmp.eq.s32.totalorder %s18, 0
      %p128 = por %p126, %p127
      %p129 = scmp.ne.s32.totalorder %s115, %s116
      %p130 = scmp.eq.s32.totalorder %s19, 1
      %p131 = por %p129, %p130
      %p133 = scmp.ne.s32.totalorder %s116, %s132
      %p134 = scmp.eq.s32.totalorder %s19, 0
      %p135 = por %p133, %p134
      %p136 = scmp.le.s32.totalorder 1, %s13
      %p137 = scmp.lt.s32.totalorder %s13, 3
      %p138 = pnand %p136, %p137
      %p139 = pneg %p138
      // Predicated region
      $region9: #{tpu_custom_call.1} parent=5 // pred_check
        _
      $region10: #{tpu_custom_call.1} parent=5 // pred_check_branch
        %141 = sbr.rel (%p138) target = $region12
      $region11: #{tpu_custom_call.1} parent=5 // pred_region
        %s142 = ssub.s32 %s13, 1
        // Predicated region
        $region13: #{tpu_custom_call.1} parent=11 // pred_check
          %p143 = pneg %p60
        $region14: #{tpu_custom_call.1} parent=11 // pred_check_branch
          %145 = sbr.rel (%p143) target = $region16
        $region15: #{tpu_custom_call.1} parent=11 // pred_region
          _
        $region16: #{tpu_custom_call.1} parent=11 // pred_fallthru
          _
        // Predicated region
        $region17: #{tpu_custom_call.1} parent=11 // pred_check
          %p146 = pneg %p81
        $region18: #{tpu_custom_call.1} parent=11 // pred_check_branch
          %148 = sbr.rel (%p146) target = $region20
        $region19: #{tpu_custom_call.1} parent=11 // pred_region
          _
        $region20: #{tpu_custom_call.1} parent=11 // pred_fallthru
          _
        // Predicated region
        $region21: #{tpu_custom_call.1} parent=11 // pred_check
          %p149 = pneg %p102
        $region22: #{tpu_custom_call.1} parent=11 // pred_check_branch
          %151 = sbr.rel (%p149) target = $region24
        $region23: #{tpu_custom_call.1} parent=11 // pred_region
          _
        $region24: #{tpu_custom_call.1} parent=11 // pred_fallthru
          _
      $region12: #{tpu_custom_call.1} parent=5 // pred_fallthru
        _
      %p152 = scmp.lt.s32.totalorder %s13, 2
      // Predicated region
      $region25: #{tpu_custom_call.1} parent=5 // pred_check
        %p153 = pneg %p152
      $region26: #{tpu_custom_call.1} parent=5 // pred_check_branch
        %155 = sbr.rel (%p153) target = $region28
      $region27: #{tpu_custom_call.1} parent=5 // pred_region
        // Predicated region
        $region29: #{tpu_custom_call.1} parent=27 // pred_check
          %p156 = pneg %p33
        $region30: #{tpu_custom_call.1} parent=27 // pred_check_branch
          %158 = sbr.rel (%p156) target = $region32
        $region31: #{tpu_custom_call.1} parent=27 // pred_region
          %p159 = scmp.lt.s32.totalorder %s13, 1
          %s160 = scalar_select %p159, %s13, 1
          %s161 = smul.addr %s160, 8
          %s162 = scalar_lea.vmem %s0, %s161
        $region32: #{tpu_custom_call.1} parent=27 // pred_fallthru
          _
      $region28: #{tpu_custom_call.1} parent=5 // pred_fallthru
        _
      %p163 = scmp.le.s32.totalorder 1, %s13
      %p164 = scmp.lt.s32.totalorder %s13, 3
      %p165 = pnand %p163, %p164
      %p166 = pneg %p165
      // Predicated region
      $region33: #{tpu_custom_call.1} parent=5 // pred_check
        _
      $region34: #{tpu_custom_call.1} parent=5 // pred_check_branch
        %168 = sbr.rel (%p165) target = $region36
      $region35: #{tpu_custom_call.1} parent=5 // pred_region
        %s169 = ssub.s32 %s13, 1
        %p170 = scmp.lt.s32.totalorder %s18, 1
        %s171 = scalar_select %p170, %s18, 1
        %s172 = smul.addr %s171, 8
        %s173 = scalar_lea.vmem %s0, %s172
        %p174 = pneg %p39
        %p175 = pneg %p36
        %p176 = pneg %p60
        %p177 = pneg %p57
        %p178 = pneg %p81
        %p179 = pneg %p78
        %p180 = pneg %p102
        %p181 = pneg %p99
        %p182 = pneg %p128
        %p183 = pneg %p125
        %s184 = sand.u32 %s115, 1
        %s185 = scalar_lea.sflag [#allocation3], %s184
        %s186 = sand.u32 %s115, 1
        %s187 = smul.addr %s186, 8
        %s188 = scalar_lea.vmem [#allocation2], %s187
        %p189 = scmp.lt.s32.totalorder %s18, 1
        %s190 = scalar_select %p189, %s18, 1
        %s191 = smul.addr %s190, 8
        %s192 = scalar_lea.vmem %s0, %s191
        %v193 = vlaneseq
        %v194 = vand.u32 %v193, 127
        %v195 = vld [vmem:[%s192] sm:$0xff]
        %196 = vset.pattern.permute.xlu0 0
        %197 = vperm.xlu0 %196, %v195
        %v198 = vpop.permute.xlu0 %197
        %vm199 = vcmp.eq.s32.totalorder %v194, %v198
        %200 = vset.pattern.permute.xlu0 1
        %201 = vperm.xlu0 %200, %v195
        %v202 = vpop.permute.xlu0 %201
        %vm203 = vcmp.eq.s32.totalorder %v194, %v202
        %vm204 = vmor %vm199, %vm203
        %205 = vset.pattern.permute.xlu0 2
        %206 = vperm.xlu0 %205, %v195
        %v207 = vpop.permute.xlu0 %206
        %vm208 = vcmp.eq.s32.totalorder %v194, %v207
        %vm209 = vmor %vm204, %vm208
        %v210 = vsel %vm209, 1, 0
        %v211 = vcvt.s32.f32 %v210
        %v212 = vld [vmem:[%s1] sm:$0xff]
        %v213 = vld [vmem:[%s1 + $0x8] sm:$0xff]
        %v214 = vld [vmem:[%s1 + $0x10] sm:$0xff]
        %v215 = vld [vmem:[%s1 + $0x18] sm:$0xff]
        %v216 = vld [vmem:[%s1 + $0x20] sm:$0xff]
        %v217 = vld [vmem:[%s1 + $0x28] sm:$0xff]
        %v218 = vld [vmem:[%s1 + $0x30] sm:$0xff]
        %v219 = vld [vmem:[%s1 + $0x38] sm:$0xff]
        %v220 = vld [vmem:[%s1 + $0x40] sm:$0xff]
        %v221 = vld [vmem:[%s1 + $0x48] sm:$0xff]
        %v222 = vld [vmem:[%s1 + $0x50] sm:$0xff]
        %v223 = vld [vmem:[%s1 + $0x58] sm:$0xff]
        %v224 = vld [vmem:[%s1 + $0x60] sm:$0xff]
        %v225 = vld [vmem:[%s1 + $0x68] sm:$0xff]
        %v226 = vld [vmem:[%s1 + $0x70] sm:$0xff]
        %v227 = vld [vmem:[%s1 + $0x78] sm:$0xff]
        %228 = vmatprep.subr.mxu0 0.0
        %229 = vmatpush1.msra.mxu0 %v212
        %230 = vmatprep.subr.mxu0 0.0
        %231 = vmatpush1.msra.mxu0 %v213
        %232 = vmatprep.subr.mxu0 0.0
        %233 = vmatpush1.msra.mxu0 %v214
        %234 = vmatprep.subr.mxu0 0.0
        %235 = vmatpush1.msra.mxu0 %v215
        %236 = vmatprep.subr.mxu0 0.0
        %237 = vmatpush1.msra.mxu0 %v216
        %238 = vmatprep.subr.mxu0 0.0
        %239 = vmatpush1.msra.mxu0 %v217
        %240 = vmatprep.subr.mxu0 0.0
        %241 = vmatpush1.msra.mxu0 %v218
        %242 = vmatprep.subr.mxu0 0.0
        %243 = vmatpush1.msra.mxu0 %v219
        %244 = vmatprep.subr.mxu0 0.0
        %245 = vmatpush1.msra.mxu0 %v220
        %246 = vmatprep.subr.mxu0 0.0
        %247 = vmatpush1.msra.mxu0 %v221
        %248 = vmatprep.subr.mxu0 0.0
        %249 = vmatpush1.msra.mxu0 %v222
        %250 = vmatprep.subr.mxu0 0.0
        %251 = vmatpush1.msra.mxu0 %v223
        %252 = vmatprep.subr.mxu0 0.0
        %253 = vmatpush1.msra.mxu0 %v224
        %254 = vmatprep.subr.mxu0 0.0
        %255 = vmatpush1.msra.mxu0 %v225
        %256 = vmatprep.subr.mxu0 0.0
        %257 = vmatpush1.msra.mxu0 %v226
        %258 = vmatprep.subr.mxu0 0.0
        %259 = vmatpush1.msra.mxu0 %v227
        %260 = vmatprep.subr.mxu0 0.0
        %261 = vmatpush1.msra.mxu0 0.0
        %262 = vmatprep.subr.mxu0 0.0
        %263 = vmatpush1.msra.mxu0 0.0
        %264 = vmatprep.subr.mxu0 0.0
        %265 = vmatpush1.msra.mxu0 0.0
        %266 = vmatprep.subr.mxu0 0.0
        %267 = vmatpush1.msra.mxu0 0.0
        %268 = vmatprep.subr.mxu0 0.0
        %269 = vmatpush1.msra.mxu0 0.0
        %270 = vmatprep.subr.mxu0 0.0
        %271 = vmatpush1.msra.mxu0 0.0
        %272 = vmatprep.subr.mxu0 0.0
        %273 = vmatpush1.msra.mxu0 0.0
        %274 = vmatprep.subr.mxu0 0.0
        %275 = vmatpush1.msra.mxu0 0.0
        %276 = vmatprep.subr.mxu0 0.0
        %277 = vmatpush1.msra.mxu0 0.0
        %278 = vmatprep.subr.mxu0 0.0
        %279 = vmatpush1.msra.mxu0 0.0
        %280 = vmatprep.subr.mxu0 0.0
        %281 = vmatpush1.msra.mxu0 0.0
        %282 = vmatprep.subr.mxu0 0.0
        %283 = vmatpush1.msra.mxu0 0.0
        %284 = vmatprep.subr.mxu0 0.0
        %285 = vmatpush1.msra.mxu0 0.0
        %286 = vmatprep.subr.mxu0 0.0
        %287 = vmatpush1.msra.mxu0 0.0
        %288 = vmatprep.subr.mxu0 0.0
        %289 = vmatpush1.msra.mxu0 0.0
        %290 = vmatprep.subr.mxu0 0.0
        %291 = vmatpush1.msra.mxu0 0.0
        %292 = vmatprep.mubr.f32.mxu0 0.0
        %293 = vmatmul.mubr.f32.gmra.mrb[0].mxu0 %v211
        %v294 = vpop.f32.mrb[0].mxu0
        %v295 = vadd.f32 0.0, %v294
        %v296 = vpop.f32.mrb[0].mxu0
        %297 = vdwg.mxu0
        %v298 = vld [vmem:[%s2] sm:$0x1]
        %v299 = vld [vmem:[%s3] sm:$0x1]
        %vm300 = vcmask 261120
        %v301 = vsel %vm300, %v295, 0.0
        %302 = vadd.xlane.f32.xlu0 %v301
        %v303 = vpop.xlane.xlu0 %302
        %v304 = vrcp.pop 32.0
        %v305 = vmul.f32 %v303, %v304
        %v306 = vsub.f32 %v295, %v305
        %v307 = vmul.f32 %v306, %v306
        %v308 = vsel %vm300, %v307, 0.0
        %309 = vadd.xlane.f32.xlu0 %v308
        %v310 = vpop.xlane.xlu0 %309
        %v311 = vmul.f32 %v310, %v304
        %v312 = vadd.f32 %v311, 1e-05
        %v313 = vrsqrt.pop %v312
        %v314 = vmul.f32 %v306, %v313
        %v316 = vlaneseq
        %v317 = vshrl.u32 %v316, 7
        %v318 = vsub.s32 0, %v317
        %v319 = vrot.slane %v298, %v318
        %v321 = vmul.f32 %v314, %v319
        %v323 = vlaneseq
        %v324 = vshrl.u32 %v323, 7
        %v325 = vsub.s32 0, %v324
        %v326 = vrot.slane %v299, %v325
        %v328 = vadd.f32 %v321, %v326
        %329 = vst.msk [vmem:[%s188] sm:$0xff] %vm300, %v328
        %s330 = sand.u32 %s115, 1
        %s331 = scalar_lea.sflag [#allocation3], %s330
        %s332 = sand.u32 %s115, 1
        %s333 = smul.addr %s332, 8
        %s334 = scalar_lea.vmem [#allocation2], %s333
        // Predicated region
        $region37: #{tpu_custom_call.1} parent=35 // pred_check
          %p335 = pneg %p125
        $region38: #{tpu_custom_call.1} parent=35 // pred_check_branch
          %337 = sbr.rel (%p335) target = $region40
        $region39: #{tpu_custom_call.1} parent=35 // pred_region
          %s339 = ssub.s32 128, 128
          %340 = vsyncadd %s331, %s339
          %s341 = smul.addr %s18, 128
          %s342 = scalar_lea.hbm %s4, %s341
          %s344 = sshll.u32 %s334, 4
          %s345 = int_to_ptr.vmem [resolvable:$true] %s344
          %347 = dma.vmem_to_hbm [thread:$0]  %s345, 128, %s342, %s331
        $region40: #{tpu_custom_call.1} parent=35 // pred_fallthru
          _
      $region36: #{tpu_custom_call.1} parent=5 // pred_fallthru
        _
      %p348 = scmp.le.s32.totalorder 2, %s13
      // Predicated region
      $region41: #{tpu_custom_call.1} parent=5 // pred_check
        %p349 = pneg %p348
      $region42: #{tpu_custom_call.1} parent=5 // pred_check_branch
        %351 = sbr.rel (%p349) target = $region44
      $region43: #{tpu_custom_call.1} parent=5 // pred_region
        %s352 = ssub.s32 %s13, 2
        // Predicated region
        $region45: #{tpu_custom_call.1} parent=43 // pred_check
          %p353 = pneg %p131
        $region46: #{tpu_custom_call.1} parent=43 // pred_check_branch
          %355 = sbr.rel (%p353) target = $region48
        $region47: #{tpu_custom_call.1} parent=43 // pred_region
          %s356 = sand.u32 %s116, 1
          %s357 = scalar_lea.sflag [#allocation3], %s356
          %s358 = sand.u32 %s116, 1
          %s359 = smul.addr %s358, 8
          %s360 = scalar_lea.vmem [#allocation2], %s359
          %361 = dma.done %s357, 128
        $region48: #{tpu_custom_call.1} parent=43 // pred_fallthru
          _
      $region44: #{tpu_custom_call.1} parent=5 // pred_fallthru
        _
    $region6: #{tpu_custom_call.1} parent=1 // loop_footer
      %s17 = sadd.s32 1, %s13
    $region7: #{tpu_custom_call.1} parent=1 // loop_footer_branch
      %12 = sbr.rel target = $region3
    $region8: #{tpu_custom_call.1} parent=1 // loop_exit
      _
    %362 = vsyncpa [#allocation3], 1
    %s363 = scalar_lea.sflag [#allocation3], 1
    %364 = vsyncpa %s363, 1

</llo_original>
